<compile_context>
chip_gen: v7x
topology: tpu7x:2x2x1
jax: 0.10.0
libtpu: 0.0.40
codegen_flags: <defaults>
</compile_context>

<pallas_src>
import functools

import jax
import jax.numpy as jnp
from jax.experimental import pallas as pl
from jax.experimental.pallas import tpu as pltpu

H_PAD = 128  # fused hidden width (64 policy + hidden_dim value, zero-padded)


def _ppo_fused_kernel(x_ref, w1_ref, b1_ref, w2_ref, b2_ref, w3_ref, b3_ref,
                      logits_ref, value_ref):
    x = x_ref[...]
    h = jnp.maximum(
        jnp.dot(x, w1_ref[...], preferred_element_type=jnp.float32) + b1_ref[...],
        0.0)
    h = jnp.maximum(
        jnp.dot(h, w2_ref[...], preferred_element_type=jnp.float32) + b2_ref[...],
        0.0)
    res = jnp.dot(h, w3_ref[...], preferred_element_type=jnp.float32) + b3_ref[...]
    n = logits_ref.shape[-1]          # static
    logits_ref[...] = res[:, :n]
    value_ref[...] = res[:, n:n + 1]


def _fuse_params(params, input_dim, out_dim, bc_hidden, hidden_dim):
    """Build zero-padded block-diagonal fused weights (tiny, f32)."""
    f32 = jnp.float32
    lo, hi = bc_hidden, bc_hidden + hidden_dim
    out_w = out_dim + 1
    assert hi <= H_PAD

    w1 = (jnp.zeros((input_dim, H_PAD), f32)
          .at[:, :lo].set(params["pw1"])
          .at[:, lo:hi].set(params["vw1"]))
    b1 = (jnp.zeros((1, H_PAD), f32)
          .at[:, :lo].set(params["pb1"])
          .at[:, lo:hi].set(params["vb1"]))
    w2 = (jnp.zeros((H_PAD, H_PAD), f32)
          .at[:lo, :lo].set(params["pw2"])
          .at[lo:hi, lo:hi].set(params["vw2"]))
    b2 = (jnp.zeros((1, H_PAD), f32)
          .at[:, :lo].set(params["pb2"])
          .at[:, lo:hi].set(params["vb2"]))
    w3 = (jnp.zeros((H_PAD, out_w), f32)
          .at[:lo, :out_dim].set(params["pw3"])
          .at[lo:hi, out_dim:out_w].set(params["vw3"]))
    b3 = (jnp.zeros((1, out_w), f32)
          .at[:, :out_dim].set(params["pb3"])
          .at[:, out_dim:out_w].set(params["vb3"]))
    return w1, b1, w2, b2, w3, b3


def _choose_tile(batch, tile_b):
    """Pick a batch tile: multiple of 8, <= 4096 (v5e scoped-VMEM safe),
    and >= 2 grid steps for large batches (v7x megacore sharding)."""
    b8 = max(8, -(-batch // 8) * 8)
    tile = max(8, min(int(tile_b), 4096))
    tile = -(-tile // 8) * 8
    if tile >= b8:
        tile = b8
        if b8 >= 512:                      # large enough to be worth splitting
            tile = -(-(b8 // 2) // 8) * 8  # ~half the batch, 8-aligned
    return tile


@functools.partial(jax.jit, static_argnames=("tile_b",))
def ppo_forward(x, params, tile_b=2048):
    """Returns (action_logits, value) exactly like PPO.forward."""
    B, input_dim = x.shape
    out_dim = params["pw3"].shape[1]
    bc_hidden = params["pw1"].shape[1]
    hidden_dim = params["vw1"].shape[1]
    out_w = out_dim + 1

    w1, b1, w2, b2, w3, b3 = _fuse_params(params, input_dim, out_dim,
                                          bc_hidden, hidden_dim)

    tile = _choose_tile(B, tile_b)
    grid = (pl.cdiv(B, tile),)

    flops = 2 * B * (input_dim * H_PAD + H_PAD * H_PAD + H_PAD * out_w)
    bytes_accessed = 4 * (B * input_dim                       # x read
                          + input_dim * H_PAD + H_PAD         # w1, b1
                          + H_PAD * H_PAD + H_PAD             # w2, b2
                          + H_PAD * out_w + out_w             # w3, b3
                          + B * out_w)                        # logits + value
    cost = pl.CostEstimate(flops=flops, transcendentals=0,
                           bytes_accessed=bytes_accessed)

    logits, value = pl.pallas_call(
        _ppo_fused_kernel,
        out_shape=(jax.ShapeDtypeStruct((B, out_dim), jnp.float32),
                   jax.ShapeDtypeStruct((B, 1), jnp.float32)),
        grid=grid,
        in_specs=[
            pl.BlockSpec((tile, input_dim), lambda i: (i, 0)),  # x: streamed
            pl.BlockSpec((input_dim, H_PAD), lambda i: (0, 0)),  # weights stay
            pl.BlockSpec((1, H_PAD), lambda i: (0, 0)),          # VMEM-resident
            pl.BlockSpec((H_PAD, H_PAD), lambda i: (0, 0)),
            pl.BlockSpec((1, H_PAD), lambda i: (0, 0)),
            pl.BlockSpec((H_PAD, out_w), lambda i: (0, 0)),
            pl.BlockSpec((1, out_w), lambda i: (0, 0)),
        ],
        out_specs=(
            pl.BlockSpec((tile, out_dim), lambda i: (i, 0)),
            pl.BlockSpec((tile, 1), lambda i: (i, 0)),
        ),
        compiler_params=pltpu.CompilerParams(
            dimension_semantics=("parallel",)),
        cost_estimate=cost,
    )(x, w1, b1, w2, b2, w3, b3)

    return logits, value


def init_params(key, input_dim, output_dim, hidden_dim, bc_hidden=64):
    """Deterministic init mimicking PyTorch nn.Linear default (U[-1/sqrt(fan_in), +])."""
    def linear(k, fan_in, fan_out):
        kw, kb = jax.random.split(k)
        bound = 1.0 / jnp.sqrt(jnp.float32(fan_in))
        w = jax.random.uniform(kw, (fan_in, fan_out), jnp.float32, -bound, bound)
        b = jax.random.uniform(kb, (1, fan_out), jnp.float32, -bound, bound)
        return w, b

    keys = jax.random.split(key, 6)
    pw1, pb1 = linear(keys[0], input_dim, bc_hidden)
    pw2, pb2 = linear(keys[1], bc_hidden, bc_hidden)
    pw3, pb3 = linear(keys[2], bc_hidden, output_dim)
    vw1, vb1 = linear(keys[3], input_dim, hidden_dim)
    vw2, vb2 = linear(keys[4], hidden_dim, hidden_dim)
    vw3, vb3 = linear(keys[5], hidden_dim, 1)
    return dict(pw1=pw1, pb1=pb1, pw2=pw2, pb2=pb2, pw3=pw3, pb3=pb3,
                vw1=vw1, vb1=vb1, vw2=vw2, vb2=vb2, vw3=vw3, vb3=vb3)


def ppo_forward_ref(x, p):
    h = jnp.maximum(x @ p["pw1"] + p["pb1"], 0.0)
    h = jnp.maximum(h @ p["pw2"] + p["pb2"], 0.0)
    logits = h @ p["pw3"] + p["pb3"]
    v = jnp.maximum(x @ p["vw1"] + p["vb1"], 0.0)
    v = jnp.maximum(v @ p["vw2"] + p["vb2"], 0.0)
    value = v @ p["vw3"] + p["vb3"]
    return logits, value


if __name__ == "__main__":
    # LunarLander-v2: obs dim 8, 4 discrete actions; hidden_dim=32, batch=8.
    input_dim, output_dim, hidden_dim, batch = 8, 4, 32, 8

    key = jax.random.PRNGKey(0)
    kx, kp = jax.random.split(key)
    x = jax.random.normal(kx, (batch, input_dim), jnp.float32)
    params = init_params(kp, input_dim, output_dim, hidden_dim)

    logits, value = ppo_forward(x, params)
    jax.block_until_ready((logits, value))

    ref_logits, ref_value = ppo_forward_ref(x, params)
    assert logits.shape == (batch, output_dim)
    assert value.shape == (batch, 1)
    assert jnp.allclose(logits, ref_logits, atol=1e-5)
    assert jnp.allclose(value, ref_value, atol=1e-5)

    # Multi-step grid (multiple of 8 rows) — exercises the >=2-step split.
    big_x = jax.random.normal(kx, (1000, input_dim), jnp.float32)
    bl, bv = ppo_forward(big_x, params)
    jax.block_until_ready((bl, bv))
    rl, rv = ppo_forward_ref(big_x, params)
    assert jnp.allclose(bl, rl, atol=1e-5)
    assert jnp.allclose(bv, rv, atol=1e-5)

    # Ragged batch (not a multiple of 8) — exercises padded reads / masked writes.
    odd_x = jax.random.normal(kp, (250, input_dim), jnp.float32)
    ol, ov = ppo_forward(odd_x, params)
    jax.block_until_ready((ol, ov))
    rol, rov = ppo_forward_ref(odd_x, params)
    assert ol.shape == (250, output_dim) and ov.shape == (250, 1)
    assert jnp.allclose(ol, rol, atol=1e-5)
    assert jnp.allclose(ov, rov, atol=1e-5)

    print("KERNEL_OK")
</pallas_src>

<mosaic_0001>
module attributes {stable_mosaic.version = 11 : i64} {
  func.func @_ppo_fused_kernel(%arg0: i32, %arg1: memref<8x8xf32, #tpu.memory_space<vmem>>, %arg2: memref<8x128xf32, #tpu.memory_space<vmem>>, %arg3: memref<1x128xf32, #tpu.memory_space<vmem>>, %arg4: memref<128x128xf32, #tpu.memory_space<vmem>>, %arg5: memref<1x128xf32, #tpu.memory_space<vmem>>, %arg6: memref<128x5xf32, #tpu.memory_space<vmem>>, %arg7: memref<1x5xf32, #tpu.memory_space<vmem>>, %arg8: memref<8x4xf32, #tpu.memory_space<vmem>>, %arg9: memref<8x1xf32, #tpu.memory_space<vmem>>) attributes {dimension_semantics = [#tpu.dimension_semantics<parallel>], iteration_bounds = array<i64: 1>, scalar_prefetch = 0 : i64, scratch_operands = 0 : i64, tpu.core_type = #tpu.core_type<tc>, window_params = [{transform_indices = @transform_0, window_bounds = array<i64: 8, 8>}, {pipeline_mode = #tpu.pipeline_mode<synchronous>, transform_indices = @transform_1, window_bounds = array<i64: 8, 128>}, {pipeline_mode = #tpu.pipeline_mode<synchronous>, transform_indices = @transform_2, window_bounds = array<i64: 1, 128>}, {pipeline_mode = #tpu.pipeline_mode<synchronous>, transform_indices = @transform_3, window_bounds = array<i64: 128, 128>}, {pipeline_mode = #tpu.pipeline_mode<synchronous>, transform_indices = @transform_4, window_bounds = array<i64: 1, 128>}, {pipeline_mode = #tpu.pipeline_mode<synchronous>, transform_indices = @transform_5, window_bounds = array<i64: 128, 5>}, {pipeline_mode = #tpu.pipeline_mode<synchronous>, transform_indices = @transform_6, window_bounds = array<i64: 1, 5>}, {transform_indices = @transform_7, window_bounds = array<i64: 8, 4>}, {transform_indices = @transform_8, window_bounds = array<i64: 8, 1>}]} {
    %c0 = arith.constant 0 : index
    %c0_0 = arith.constant 0 : index
    %0 = vector.load %arg1[%c0, %c0_0] : memref<8x8xf32, #tpu.memory_space<vmem>>, vector<8x8xf32>
    %c0_1 = arith.constant 0 : index
    %c0_2 = arith.constant 0 : index
    %1 = vector.load %arg2[%c0_1, %c0_2] : memref<8x128xf32, #tpu.memory_space<vmem>>, vector<8x128xf32>
    %cst = arith.constant dense<0.000000e+00> : vector<8x128xf32>
    %2 = tpu.matmul %0, %1, %cst {dimension_numbers = #tpu.dot_dimension_numbers<[1], [0], [0], [1], [0, 0, 1, 1], [], []>} : vector<8x8xf32>, vector<8x128xf32>, vector<8x128xf32> -> vector<8x128xf32>
    %c0_3 = arith.constant 0 : index
    %c0_4 = arith.constant 0 : index
    %3 = vector.load %arg3[%c0_3, %c0_4] : memref<1x128xf32, #tpu.memory_space<vmem>>, vector<1x128xf32>
    %4 = vector.broadcast %3 : vector<1x128xf32> to vector<8x128xf32>
    %5 = arith.addf %2, %4 : vector<8x128xf32>
    %cst_5 = arith.constant 0.000000e+00 : f32
    %6 = vector.broadcast %cst_5 : f32 to vector<8x128xf32>
    %7 = arith.maximumf %5, %6 : vector<8x128xf32>
    %c0_6 = arith.constant 0 : index
    %c0_7 = arith.constant 0 : index
    %8 = vector.load %arg4[%c0_6, %c0_7] : memref<128x128xf32, #tpu.memory_space<vmem>>, vector<128x128xf32>
    %cst_8 = arith.constant dense<0.000000e+00> : vector<8x128xf32>
    %9 = tpu.matmul %7, %8, %cst_8 {dimension_numbers = #tpu.dot_dimension_numbers<[1], [0], [0], [1], [0, 0, 1, 1], [], []>} : vector<8x128xf32>, vector<128x128xf32>, vector<8x128xf32> -> vector<8x128xf32>
    %c0_9 = arith.constant 0 : index
    %c0_10 = arith.constant 0 : index
    %10 = vector.load %arg5[%c0_9, %c0_10] : memref<1x128xf32, #tpu.memory_space<vmem>>, vector<1x128xf32>
    %11 = vector.broadcast %10 : vector<1x128xf32> to vector<8x128xf32>
    %12 = arith.addf %9, %11 : vector<8x128xf32>
    %cst_11 = arith.constant 0.000000e+00 : f32
    %13 = vector.broadcast %cst_11 : f32 to vector<8x128xf32>
    %14 = arith.maximumf %12, %13 : vector<8x128xf32>
    %c0_12 = arith.constant 0 : index
    %c0_13 = arith.constant 0 : index
    %15 = vector.load %arg6[%c0_12, %c0_13] : memref<128x5xf32, #tpu.memory_space<vmem>>, vector<128x5xf32>
    %cst_14 = arith.constant dense<0.000000e+00> : vector<8x5xf32>
    %16 = tpu.matmul %14, %15, %cst_14 {dimension_numbers = #tpu.dot_dimension_numbers<[1], [0], [0], [1], [0, 0, 1, 1], [], []>} : vector<8x128xf32>, vector<128x5xf32>, vector<8x5xf32> -> vector<8x5xf32>
    %c0_15 = arith.constant 0 : index
    %c0_16 = arith.constant 0 : index
    %17 = vector.load %arg7[%c0_15, %c0_16] : memref<1x5xf32, #tpu.memory_space<vmem>>, vector<1x5xf32>
    %18 = vector.broadcast %17 : vector<1x5xf32> to vector<8x5xf32>
    %19 = arith.addf %16, %18 : vector<8x5xf32>
    %20 = vector.extract_strided_slice %19 {offsets = [0, 0], sizes = [8, 4], strides = [1, 1]} : vector<8x5xf32> to vector<8x4xf32>
    %c0_17 = arith.constant 0 : index
    %c0_18 = arith.constant 0 : index
    %21 = vector.load %arg8[%c0_17, %c0_18] : memref<8x4xf32, #tpu.memory_space<vmem>>, vector<8x4xf32>
    tpu.vector_store %arg8[%c0_17, %c0_18], %20 {strides = array<i32>} : memref<8x4xf32, #tpu.memory_space<vmem>>, vector<8x4xf32>,
    %22 = vector.extract_strided_slice %19 {offsets = [0, 4], sizes = [8, 1], strides = [1, 1]} : vector<8x5xf32> to vector<8x1xf32>
    %c0_19 = arith.constant 0 : index
    %c0_20 = arith.constant 0 : index
    %23 = vector.load %arg9[%c0_19, %c0_20] : memref<8x1xf32, #tpu.memory_space<vmem>>, vector<8x1xf32>
    tpu.vector_store %arg9[%c0_19, %c0_20], %22 {strides = array<i32>} : memref<8x1xf32, #tpu.memory_space<vmem>>, vector<8x1xf32>,
    return
  }
  func.func @transform_0(%arg0: i32) -> (i32, i32) {
    %c0_i32 = arith.constant 0 : i32
    %c0_i32_0 = arith.constant 0 : i32
    return %arg0, %c0_i32 : i32, i32
  }
  func.func @transform_1(%arg0: i32) -> (i32, i32) {
    %c0_i32 = arith.constant 0 : i32
    %c0_i32_0 = arith.constant 0 : i32
    %c0_i32_1 = arith.constant 0 : i32
    return %c0_i32, %c0_i32_0 : i32, i32
  }
  func.func @transform_2(%arg0: i32) -> (i32, i32) {
    %c0_i32 = arith.constant 0 : i32
    %c0_i32_0 = arith.constant 0 : i32
    %c0_i32_1 = arith.constant 0 : i32
    return %c0_i32, %c0_i32_0 : i32, i32
  }
  func.func @transform_3(%arg0: i32) -> (i32, i32) {
    %c0_i32 = arith.constant 0 : i32
    %c0_i32_0 = arith.constant 0 : i32
    %c0_i32_1 = arith.constant 0 : i32
    return %c0_i32, %c0_i32_0 : i32, i32
  }
  func.func @transform_4(%arg0: i32) -> (i32, i32) {
    %c0_i32 = arith.constant 0 : i32
    %c0_i32_0 = arith.constant 0 : i32
    %c0_i32_1 = arith.constant 0 : i32
    return %c0_i32, %c0_i32_0 : i32, i32
  }
  func.func @transform_5(%arg0: i32) -> (i32, i32) {
    %c0_i32 = arith.constant 0 : i32
    %c0_i32_0 = arith.constant 0 : i32
    %c0_i32_1 = arith.constant 0 : i32
    return %c0_i32, %c0_i32_0 : i32, i32
  }
  func.func @transform_6(%arg0: i32) -> (i32, i32) {
    %c0_i32 = arith.constant 0 : i32
    %c0_i32_0 = arith.constant 0 : i32
    %c0_i32_1 = arith.constant 0 : i32
    return %c0_i32, %c0_i32_0 : i32, i32
  }
  func.func @transform_7(%arg0: i32) -> (i32, i32) {
    %c0_i32 = arith.constant 0 : i32
    %c0_i32_0 = arith.constant 0 : i32
    return %arg0, %c0_i32 : i32, i32
  }
  func.func @transform_8(%arg0: i32) -> (i32, i32) {
    %c0_i32 = arith.constant 0 : i32
    %c0_i32_0 = arith.constant 0 : i32
    return %arg0, %c0_i32 : i32, i32
  }
}

</mosaic_0001>

<llo_original>
// kernel: ppo_forward.1
$region0: #{ppo_forward.1}
  #allocation0 [shape = 'u32[]', space=smem, size = 0x4, offset = 0x4, fixed_abs, tag = 'smem constant byte address 0x4 - core index']
  #allocation1 [shape = 'u32[144,128]{1,0:T(1,128)}', space=vmem, size = 0x12000, scoped, tag = 'internal scratch']
  %s0 = inlined_call_operand.vmem [shape: f32[8,8], index: 0, kind: input, shape index: {}]
  %s1 = inlined_call_operand.vmem [shape: f32[8,128], index: 1, kind: input, shape index: {}]
  %s2 = inlined_call_operand.vmem [shape: f32[1,128], index: 2, kind: input, shape index: {}]
  %s3 = inlined_call_operand.vmem [shape: f32[128,128], index: 3, kind: input, shape index: {}]
  %s4 = inlined_call_operand.vmem [shape: f32[1,128], index: 4, kind: input, shape index: {}]
  %s5 = inlined_call_operand.vmem [shape: f32[128,5], index: 5, kind: input, shape index: {}]
  %s6 = inlined_call_operand.vmem [shape: f32[1,5], index: 6, kind: input, shape index: {}]
  %s7 = inlined_call_operand.vmem [shape: f32[8,4], index: 7, kind: output, shape index: {0}]
  %s8 = inlined_call_operand.vmem [shape: f32[8,1], index: 8, kind: output, shape index: {1}]
  %9 = xla_tuple %s7, %s8
  %s10 = sld [smem:[#allocation0]]
  $region46: #{ppo_forward.1} parent=0
    _
  %s12 = ssub.s32 1, %s10
  %s13 = scalar_select 0, %s12, %s10
  // Predicated region
  $region2: #{ppo_forward.1} parent=0 // pred_check
    _
  $region3: #{ppo_forward.1} parent=0 // pred_check_branch
    %15 = sbr.rel (0) target = $region5
  $region4: #{ppo_forward.1} parent=0 // pred_region
    _
  $region5: #{ppo_forward.1} parent=0 // pred_fallthru
    _
  // Predicated region
  $region6: #{ppo_forward.1} parent=0 // pred_check
    _
  $region7: #{ppo_forward.1} parent=0 // pred_check_branch
    %17 = sbr.rel (0) target = $region9
  $region8: #{ppo_forward.1} parent=0 // pred_region
    _
  $region9: #{ppo_forward.1} parent=0 // pred_fallthru
    _
  // Predicated region
  $region10: #{ppo_forward.1} parent=0 // pred_check
    _
  $region11: #{ppo_forward.1} parent=0 // pred_check_branch
    %19 = sbr.rel (0) target = $region13
  $region12: #{ppo_forward.1} parent=0 // pred_region
    _
  $region13: #{ppo_forward.1} parent=0 // pred_fallthru
    _
  // Predicated region
  $region14: #{ppo_forward.1} parent=0 // pred_check
    _
  $region15: #{ppo_forward.1} parent=0 // pred_check_branch
    %21 = sbr.rel (0) target = $region17
  $region16: #{ppo_forward.1} parent=0 // pred_region
    _
  $region17: #{ppo_forward.1} parent=0 // pred_fallthru
    _
  // Predicated region
  $region18: #{ppo_forward.1} parent=0 // pred_check
    _
  $region19: #{ppo_forward.1} parent=0 // pred_check_branch
    %23 = sbr.rel (0) target = $region21
  $region20: #{ppo_forward.1} parent=0 // pred_region
    _
  $region21: #{ppo_forward.1} parent=0 // pred_fallthru
    _
  // Predicated region
  $region22: #{ppo_forward.1} parent=0 // pred_check
    _
  $region23: #{ppo_forward.1} parent=0 // pred_check_branch
    %25 = sbr.rel (0) target = $region25
  $region24: #{ppo_forward.1} parent=0 // pred_region
    _
  $region25: #{ppo_forward.1} parent=0 // pred_fallthru
    _
  // Predicated region
  $region26: #{ppo_forward.1} parent=0 // pred_check
    _
  $region27: #{ppo_forward.1} parent=0 // pred_check_branch
    %27 = sbr.rel (0) target = $region29
  $region28: #{ppo_forward.1} parent=0 // pred_region
    _
  $region29: #{ppo_forward.1} parent=0 // pred_fallthru
    _
  %v28 = vld [vmem:[%s0] sm:$0xff]
  %v29 = vld [vmem:[%s1] sm:$0xff]
  %v30 = vld [vmem:[%s2] sm:$0x1]
  %v32 = vlaneseq
  %v33 = vshrl.u32 %v32, 7
  %v34 = vsub.s32 0, %v33
  %v35 = vrot.slane %v30, %v34
  %vm37 = vcmask 64512
  %v39 = vsel %vm37, %v28, 0
  %41 = vmatprep.subr.mxu0 0.0
  %42 = vmatpush1.msra.mxu0 %v29
  %43 = vmatprep.subr.mxu0 0.0
  %44 = vmatpush1.msra.mxu0 0.0
  %45 = vmatprep.subr.mxu0 0.0
  %46 = vmatpush1.msra.mxu0 0.0
  %47 = vmatprep.subr.mxu0 0.0
  %48 = vmatpush1.msra.mxu0 0.0
  %49 = vmatprep.subr.mxu0 0.0
  %50 = vmatpush1.msra.mxu0 0.0
  %51 = vmatprep.subr.mxu0 0.0
  %52 = vmatpush1.msra.mxu0 0.0
  %53 = vmatprep.subr.mxu0 0.0
  %54 = vmatpush1.msra.mxu0 0.0
  %55 = vmatprep.subr.mxu0 0.0
  %56 = vmatpush1.msra.mxu0 0.0
  %57 = vmatprep.subr.mxu0 0.0
  %58 = vmatpush1.msra.mxu0 0.0
  %59 = vmatprep.subr.mxu0 0.0
  %60 = vmatpush1.msra.mxu0 0.0
  %61 = vmatprep.subr.mxu0 0.0
  %62 = vmatpush1.msra.mxu0 0.0
  %63 = vmatprep.subr.mxu0 0.0
  %64 = vmatpush1.msra.mxu0 0.0
  %65 = vmatprep.subr.mxu0 0.0
  %66 = vmatpush1.msra.mxu0 0.0
  %67 = vmatprep.subr.mxu0 0.0
  %68 = vmatpush1.msra.mxu0 0.0
  %69 = vmatprep.subr.mxu0 0.0
  %70 = vmatpush1.msra.mxu0 0.0
  %71 = vmatprep.subr.mxu0 0.0
  %72 = vmatpush1.msra.mxu0 0.0
  %73 = vmatprep.subr.mxu0 0.0
  %74 = vmatpush1.msra.mxu0 0.0
  %75 = vmatprep.subr.mxu0 0.0
  %76 = vmatpush1.msra.mxu0 0.0
  %77 = vmatprep.subr.mxu0 0.0
  %78 = vmatpush1.msra.mxu0 0.0
  %79 = vmatprep.subr.mxu0 0.0
  %80 = vmatpush1.msra.mxu0 0.0
  %81 = vmatprep.subr.mxu0 0.0
  %82 = vmatpush1.msra.mxu0 0.0
  %83 = vmatprep.subr.mxu0 0.0
  %84 = vmatpush1.msra.mxu0 0.0
  %85 = vmatprep.subr.mxu0 0.0
  %86 = vmatpush1.msra.mxu0 0.0
  %87 = vmatprep.subr.mxu0 0.0
  %88 = vmatpush1.msra.mxu0 0.0
  %89 = vmatprep.subr.mxu0 0.0
  %90 = vmatpush1.msra.mxu0 0.0
  %91 = vmatprep.subr.mxu0 0.0
  %92 = vmatpush1.msra.mxu0 0.0
  %93 = vmatprep.subr.mxu0 0.0
  %94 = vmatpush1.msra.mxu0 0.0
  %95 = vmatprep.subr.mxu0 0.0
  %96 = vmatpush1.msra.mxu0 0.0
  %97 = vmatprep.subr.mxu0 0.0
  %98 = vmatpush1.msra.mxu0 0.0
  %99 = vmatprep.subr.mxu0 0.0
  %100 = vmatpush1.msra.mxu0 0.0
  %101 = vmatprep.subr.mxu0 0.0
  %102 = vmatpush1.msra.mxu0 0.0
  %103 = vmatprep.subr.mxu0 0.0
  %104 = vmatpush1.msra.mxu0 0.0
  %105 = vmatprep.mubr.f32.mxu0 0.0
  %106 = vmatmul.mubr.f32.gmra.mrb[0].mxu0 %v39
  %v107 = vpop.f32.mrb[0].mxu0
  %v108 = vadd.f32 %v35, %v107
  %v109 = vpop.f32.mrb[0].mxu0
  %110 = vdwg.mxu0
  %v111 = vmax.f32 %v108, 0.0
  %v112 = vld [vmem:[%s3] sm:$0xff]
  %v113 = vld [vmem:[%s3 + $0x8] sm:$0xff]
  %v114 = vld [vmem:[%s3 + $0x10] sm:$0xff]
  %v115 = vld [vmem:[%s3 + $0x18] sm:$0xff]
  %v116 = vld [vmem:[%s3 + $0x20] sm:$0xff]
  %v117 = vld [vmem:[%s3 + $0x28] sm:$0xff]
  %v118 = vld [vmem:[%s3 + $0x30] sm:$0xff]
  %v119 = vld [vmem:[%s3 + $0x38] sm:$0xff]
  %v120 = vld [vmem:[%s3 + $0x40] sm:$0xff]
  %v121 = vld [vmem:[%s3 + $0x48] sm:$0xff]
  %v122 = vld [vmem:[%s3 + $0x50] sm:$0xff]
  %v123 = vld [vmem:[%s3 + $0x58] sm:$0xff]
  %v124 = vld [vmem:[%s3 + $0x60] sm:$0xff]
  %v125 = vld [vmem:[%s3 + $0x68] sm:$0xff]
  %v126 = vld [vmem:[%s3 + $0x70] sm:$0xff]
  %v127 = vld [vmem:[%s3 + $0x78] sm:$0xff]
  %v128 = vld [vmem:[%s4] sm:$0x1]
  %v130 = vlaneseq
  %v131 = vshrl.u32 %v130, 7
  %v132 = vsub.s32 0, %v131
  %v133 = vrot.slane %v128, %v132
  %135 = vmatprep.subr.mxu0 0.0
  %136 = vmatpush1.msra.mxu0 %v112
  %137 = vmatprep.subr.mxu0 0.0
  %138 = vmatpush1.msra.mxu0 %v113
  %139 = vmatprep.subr.mxu0 0.0
  %140 = vmatpush1.msra.mxu0 %v114
  %141 = vmatprep.subr.mxu0 0.0
  %142 = vmatpush1.msra.mxu0 %v115
  %143 = vmatprep.subr.mxu0 0.0
  %144 = vmatpush1.msra.mxu0 %v116
  %145 = vmatprep.subr.mxu0 0.0
  %146 = vmatpush1.msra.mxu0 %v117
  %147 = vmatprep.subr.mxu0 0.0
  %148 = vmatpush1.msra.mxu0 %v118
  %149 = vmatprep.subr.mxu0 0.0
  %150 = vmatpush1.msra.mxu0 %v119
  %151 = vmatprep.subr.mxu0 0.0
  %152 = vmatpush1.msra.mxu0 %v120
  %153 = vmatprep.subr.mxu0 0.0
  %154 = vmatpush1.msra.mxu0 %v121
  %155 = vmatprep.subr.mxu0 0.0
  %156 = vmatpush1.msra.mxu0 %v122
  %157 = vmatprep.subr.mxu0 0.0
  %158 = vmatpush1.msra.mxu0 %v123
  %159 = vmatprep.subr.mxu0 0.0
  %160 = vmatpush1.msra.mxu0 %v124
  %161 = vmatprep.subr.mxu0 0.0
  %162 = vmatpush1.msra.mxu0 %v125
  %163 = vmatprep.subr.mxu0 0.0
  %164 = vmatpush1.msra.mxu0 %v126
  %165 = vmatprep.subr.mxu0 0.0
  %166 = vmatpush1.msra.mxu0 %v127
  %167 = vmatprep.subr.mxu0 0.0
  %168 = vmatpush1.msra.mxu0 0.0
  %169 = vmatprep.subr.mxu0 0.0
  %170 = vmatpush1.msra.mxu0 0.0
  %171 = vmatprep.subr.mxu0 0.0
  %172 = vmatpush1.msra.mxu0 0.0
  %173 = vmatprep.subr.mxu0 0.0
  %174 = vmatpush1.msra.mxu0 0.0
  %175 = vmatprep.subr.mxu0 0.0
  %176 = vmatpush1.msra.mxu0 0.0
  %177 = vmatprep.subr.mxu0 0.0
  %178 = vmatpush1.msra.mxu0 0.0
  %179 = vmatprep.subr.mxu0 0.0
  %180 = vmatpush1.msra.mxu0 0.0
  %181 = vmatprep.subr.mxu0 0.0
  %182 = vmatpush1.msra.mxu0 0.0
  %183 = vmatprep.subr.mxu0 0.0
  %184 = vmatpush1.msra.mxu0 0.0
  %185 = vmatprep.subr.mxu0 0.0
  %186 = vmatpush1.msra.mxu0 0.0
  %187 = vmatprep.subr.mxu0 0.0
  %188 = vmatpush1.msra.mxu0 0.0
  %189 = vmatprep.subr.mxu0 0.0
  %190 = vmatpush1.msra.mxu0 0.0
  %191 = vmatprep.subr.mxu0 0.0
  %192 = vmatpush1.msra.mxu0 0.0
  %193 = vmatprep.subr.mxu0 0.0
  %194 = vmatpush1.msra.mxu0 0.0
  %195 = vmatprep.subr.mxu0 0.0
  %196 = vmatpush1.msra.mxu0 0.0
  %197 = vmatprep.subr.mxu0 0.0
  %198 = vmatpush1.msra.mxu0 0.0
  %199 = vmatprep.mubr.f32.mxu0 0.0
  %200 = vmatmul.mubr.f32.gmra.mrb[0].mxu0 %v111
  %v201 = vpop.f32.mrb[0].mxu0
  %v202 = vadd.f32 %v133, %v201
  %v203 = vpop.f32.mrb[0].mxu0
  %204 = vdwg.mxu0
  %v205 = vmax.f32 %v202, 0.0
  %v206 = vld [vmem:[%s5] sm:$0xff]
  %v207 = vld [vmem:[%s5 + $0x8] sm:$0xff]
  %v208 = vld [vmem:[%s5 + $0x10] sm:$0xff]
  %v209 = vld [vmem:[%s5 + $0x18] sm:$0xff]
  %v210 = vld [vmem:[%s5 + $0x20] sm:$0xff]
  %v211 = vld [vmem:[%s5 + $0x28] sm:$0xff]
  %v212 = vld [vmem:[%s5 + $0x30] sm:$0xff]
  %v213 = vld [vmem:[%s5 + $0x38] sm:$0xff]
  %v214 = vld [vmem:[%s5 + $0x40] sm:$0xff]
  %v215 = vld [vmem:[%s5 + $0x48] sm:$0xff]
  %v216 = vld [vmem:[%s5 + $0x50] sm:$0xff]
  %v217 = vld [vmem:[%s5 + $0x58] sm:$0xff]
  %v218 = vld [vmem:[%s5 + $0x60] sm:$0xff]
  %v219 = vld [vmem:[%s5 + $0x68] sm:$0xff]
  %v220 = vld [vmem:[%s5 + $0x70] sm:$0xff]
  %v221 = vld [vmem:[%s5 + $0x78] sm:$0xff]
  %v222 = vld [vmem:[%s6] sm:$0x1]
  %v224 = vlaneseq
  %v225 = vshrl.u32 %v224, 7
  %v226 = vsub.s32 0, %v225
  %v227 = vrot.slane %v222, %v226
  %229 = vmatprep.subr.mxu0 0.0
  %230 = vmatpush1.msra.mxu0 %v206
  %231 = vmatprep.subr.mxu0 0.0
  %232 = vmatpush1.msra.mxu0 %v207
  %233 = vmatprep.subr.mxu0 0.0
  %234 = vmatpush1.msra.mxu0 %v208
  %235 = vmatprep.subr.mxu0 0.0
  %236 = vmatpush1.msra.mxu0 %v209
  %237 = vmatprep.subr.mxu0 0.0
  %238 = vmatpush1.msra.mxu0 %v210
  %239 = vmatprep.subr.mxu0 0.0
  %240 = vmatpush1.msra.mxu0 %v211
  %241 = vmatprep.subr.mxu0 0.0
  %242 = vmatpush1.msra.mxu0 %v212
  %243 = vmatprep.subr.mxu0 0.0
  %244 = vmatpush1.msra.mxu0 %v213
  %245 = vmatprep.subr.mxu0 0.0
  %246 = vmatpush1.msra.mxu0 %v214
  %247 = vmatprep.subr.mxu0 0.0
  %248 = vmatpush1.msra.mxu0 %v215
  %249 = vmatprep.subr.mxu0 0.0
  %250 = vmatpush1.msra.mxu0 %v216
  %251 = vmatprep.subr.mxu0 0.0
  %252 = vmatpush1.msra.mxu0 %v217
  %253 = vmatprep.subr.mxu0 0.0
  %254 = vmatpush1.msra.mxu0 %v218
  %255 = vmatprep.subr.mxu0 0.0
  %256 = vmatpush1.msra.mxu0 %v219
  %257 = vmatprep.subr.mxu0 0.0
  %258 = vmatpush1.msra.mxu0 %v220
  %259 = vmatprep.subr.mxu0 0.0
  %260 = vmatpush1.msra.mxu0 %v221
  %261 = vmatprep.subr.mxu0 0.0
  %262 = vmatpush1.msra.mxu0 0.0
  %263 = vmatprep.subr.mxu0 0.0
  %264 = vmatpush1.msra.mxu0 0.0
  %265 = vmatprep.subr.mxu0 0.0
  %266 = vmatpush1.msra.mxu0 0.0
  %267 = vmatprep.subr.mxu0 0.0
  %268 = vmatpush1.msra.mxu0 0.0
  %269 = vmatprep.subr.mxu0 0.0
  %270 = vmatpush1.msra.mxu0 0.0
  %271 = vmatprep.subr.mxu0 0.0
  %272 = vmatpush1.msra.mxu0 0.0
  %273 = vmatprep.subr.mxu0 0.0
  %274 = vmatpush1.msra.mxu0 0.0
  %275 = vmatprep.subr.mxu0 0.0
  %276 = vmatpush1.msra.mxu0 0.0
  %277 = vmatprep.subr.mxu0 0.0
  %278 = vmatpush1.msra.mxu0 0.0
  %279 = vmatprep.subr.mxu0 0.0
  %280 = vmatpush1.msra.mxu0 0.0
  %281 = vmatprep.subr.mxu0 0.0
  %282 = vmatpush1.msra.mxu0 0.0
  %283 = vmatprep.subr.mxu0 0.0
  %284 = vmatpush1.msra.mxu0 0.0
  %285 = vmatprep.subr.mxu0 0.0
  %286 = vmatpush1.msra.mxu0 0.0
  %287 = vmatprep.subr.mxu0 0.0
  %288 = vmatpush1.msra.mxu0 0.0
  %289 = vmatprep.subr.mxu0 0.0
  %290 = vmatpush1.msra.mxu0 0.0
  %291 = vmatprep.subr.mxu0 0.0
  %292 = vmatpush1.msra.mxu0 0.0
  %293 = vmatprep.mubr.f32.mxu0 0.0
  %294 = vmatmul.mubr.f32.gmra.mrb[0].mxu0 %v205
  %v295 = vpop.f32.mrb[0].mxu0
  %v296 = vadd.f32 %v227, %v295
  %v297 = vpop.f32.mrb[0].mxu0
  %298 = vdwg.mxu0
  %vm299 = vcmask 31744
  %300 = vst.msk [vmem:[%s7] sm:$0xff] %vm299, %v296
  %302 = vrot.lane.b32.xlu0 %v296, 124
  %v303 = vpop.permute.xlu0 %302
  %vm305 = vcmask 7168
  %306 = vst.msk [vmem:[%s8] sm:$0xff] %vm305, %v303
  // Predicated region
  $region30: #{ppo_forward.1} parent=0 // pred_check
    _
  $region31: #{ppo_forward.1} parent=0 // pred_check_branch
    %308 = sbr.rel (0) target = $region33
  $region32: #{ppo_forward.1} parent=0 // pred_region
    _
  $region33: #{ppo_forward.1} parent=0 // pred_fallthru
    _
  // Predicated region
  $region34: #{ppo_forward.1} parent=0 // pred_check
    _
  $region35: #{ppo_forward.1} parent=0 // pred_check_branch
    %310 = sbr.rel (0) target = $region37
  $region36: #{ppo_forward.1} parent=0 // pred_region
    _
  $region37: #{ppo_forward.1} parent=0 // pred_fallthru
    _
  // Predicated region
  $region38: #{ppo_forward.1} parent=0 // pred_check
    _
  $region39: #{ppo_forward.1} parent=0 // pred_check_branch
    %312 = sbr.rel (0) target = $region41
  $region40: #{ppo_forward.1} parent=0 // pred_region
    _
  $region41: #{ppo_forward.1} parent=0 // pred_fallthru
    _
  // Predicated region
  $region42: #{ppo_forward.1} parent=0 // pred_check
    _
  $region43: #{ppo_forward.1} parent=0 // pred_check_branch
    %314 = sbr.rel (0) target = $region45
  $region44: #{ppo_forward.1} parent=0 // pred_region
    _
  $region45: #{ppo_forward.1} parent=0 // pred_fallthru
    _

</llo_original>
